<compile_context>
chip_gen: v5e
topology: v5e:2x2
jax: 0.10.0
libtpu: 0.0.40
codegen_flags: <defaults>
</compile_context>

<pallas_src>
import math

import jax
import jax.numpy as jnp
from jax.experimental import pallas as pl
from jax.experimental.pallas import tpu as pltpu

_LANES = 128
_BLOCK_ROWS = 2048                      # 2048 x 128 f32 = 1 MiB per operand block
_BLOCK_ELEMS = _BLOCK_ROWS * _LANES     # 1-D fallback block (multiple of 8*128)


def _add_kernel(a_ref, b_ref, o_ref):
    o_ref[...] = a_ref[...] + b_ref[...]


def pallas_add(x47: jax.Array, x55: jax.Array) -> jax.Array:
    assert x47.shape == x55.shape and x47.dtype == x55.dtype
    orig_shape = x47.shape
    total = math.prod(orig_shape)

    a = x47.reshape(-1)
    b = x55.reshape(-1)

    if total % _LANES == 0:
        # Lane-dense 2-D slab: last dim = 128 -> full-width, unmasked vst.
        rows = total // _LANES
        a_in = a.reshape(rows, _LANES)
        b_in = b.reshape(rows, _LANES)
        out_shape = jax.ShapeDtypeStruct((rows, _LANES), x47.dtype)

        if rows <= _BLOCK_ROWS:
            # Small problem (this module: rows = 1029): one full-extent block.
            # A full-array block is exempt from the (8,128) divisibility rule.
            grid = (1,)
            spec = pl.BlockSpec((rows, _LANES), lambda i: (0, 0))
        else:
            # Large problem: (8,128)-aligned 1 MiB blocks, cdiv grid; Pallas
            # masks the partial tail block when rows % _BLOCK_ROWS != 0.
            grid = (pl.cdiv(rows, _BLOCK_ROWS),)
            spec = pl.BlockSpec((_BLOCK_ROWS, _LANES), lambda i: (i, 0))
    else:
        # total not a multiple of 128: stay flat 1-D (no pad/slice HBM copies);
        # block length is a multiple of 1024 elements, tail block is masked.
        a_in, b_in = a, b
        out_shape = jax.ShapeDtypeStruct((total,), x47.dtype)

        if total <= _BLOCK_ELEMS:
            grid = (1,)
            spec = pl.BlockSpec((total,), lambda i: (0,))
        else:
            grid = (pl.cdiv(total, _BLOCK_ELEMS),)
            spec = pl.BlockSpec((_BLOCK_ELEMS,), lambda i: (i,))

    out = pl.pallas_call(
        _add_kernel,
        out_shape=out_shape,
        grid=grid,
        in_specs=[spec, spec],
        out_specs=spec,
        compiler_params=pltpu.CompilerParams(
            # Lets v7x's two TensorCores split the grid; no-op on v5e/v6e.
            dimension_semantics=("parallel",),
        ),
    )(a_in, b_in)

    return out.reshape(orig_shape)


if __name__ == "__main__":
    key = jax.random.PRNGKey(0)
    k1, k2 = jax.random.split(key)

    # Shapes match the reference module: torch.Size([1, 168, 28, 28])
    x47 = jax.random.normal(k1, (1, 168, 28, 28), dtype=jnp.float32)
    x55 = jax.random.normal(k2, (1, 168, 28, 28), dtype=jnp.float32)

    y = pallas_add(x47, x55)
    jax.block_until_ready(y)

    # Verify against plain-JAX reference.
    ref = x47 + x55
    assert y.shape == ref.shape and y.dtype == ref.dtype
    assert jnp.allclose(y, ref, atol=1e-6, rtol=1e-6)

    print("KERNEL_OK")
</pallas_src>

<mosaic_0001>
module attributes {stable_mosaic.version = 11 : i64} {
  func.func @_add_kernel(%arg0: i32, %arg1: memref<1029x128xf32, #tpu.memory_space<vmem>>, %arg2: memref<1029x128xf32, #tpu.memory_space<vmem>>, %arg3: memref<1029x128xf32, #tpu.memory_space<vmem>>) attributes {dimension_semantics = [#tpu.dimension_semantics<parallel>], iteration_bounds = array<i64: 1>, scalar_prefetch = 0 : i64, scratch_operands = 0 : i64, tpu.core_type = #tpu.core_type<tc>, window_params = [{pipeline_mode = #tpu.pipeline_mode<synchronous>, transform_indices = @transform_0, window_bounds = array<i64: 1029, 128>}, {pipeline_mode = #tpu.pipeline_mode<synchronous>, transform_indices = @transform_1, window_bounds = array<i64: 1029, 128>}, {pipeline_mode = #tpu.pipeline_mode<synchronous>, transform_indices = @transform_2, window_bounds = array<i64: 1029, 128>}]} {
    %c0 = arith.constant 0 : index
    %c0_0 = arith.constant 0 : index
    %0 = vector.load %arg1[%c0, %c0_0] : memref<1029x128xf32, #tpu.memory_space<vmem>>, vector<1029x128xf32>
    %c0_1 = arith.constant 0 : index
    %c0_2 = arith.constant 0 : index
    %1 = vector.load %arg2[%c0_1, %c0_2] : memref<1029x128xf32, #tpu.memory_space<vmem>>, vector<1029x128xf32>
    %2 = arith.addf %0, %1 : vector<1029x128xf32>
    %c0_3 = arith.constant 0 : index
    %c0_4 = arith.constant 0 : index
    %3 = vector.load %arg3[%c0_3, %c0_4] : memref<1029x128xf32, #tpu.memory_space<vmem>>, vector<1029x128xf32>
    tpu.vector_store %arg3[%c0_3, %c0_4], %2 {strides = array<i32>} : memref<1029x128xf32, #tpu.memory_space<vmem>>, vector<1029x128xf32>,
    return
  }
  func.func @transform_0(%arg0: i32) -> (i32, i32) {
    %c0_i32 = arith.constant 0 : i32
    %c0_i32_0 = arith.constant 0 : i32
    %c0_i32_1 = arith.constant 0 : i32
    return %c0_i32, %c0_i32_0 : i32, i32
  }
  func.func @transform_1(%arg0: i32) -> (i32, i32) {
    %c0_i32 = arith.constant 0 : i32
    %c0_i32_0 = arith.constant 0 : i32
    %c0_i32_1 = arith.constant 0 : i32
    return %c0_i32, %c0_i32_0 : i32, i32
  }
  func.func @transform_2(%arg0: i32) -> (i32, i32) {
    %c0_i32 = arith.constant 0 : i32
    %c0_i32_0 = arith.constant 0 : i32
    %c0_i32_1 = arith.constant 0 : i32
    return %c0_i32, %c0_i32_0 : i32, i32
  }
}

</mosaic_0001>

<llo_original>
// kernel: tpu_custom_call.1
$region0: #{tpu_custom_call.1}
  #allocation0 [shape = 'u32[]', space=smem, size = 0x4, offset = 0x4, fixed_abs, tag = 'smem constant byte address 0x4 - core index']
  #allocation1 [shape = 'u32[72,128]{1,0:T(1,128)}', space=vmem, size = 0x9000, scoped, tag = 'internal scratch']
  %s0 = inlined_call_operand.hbm [shape: f32[1029,128], index: 0, kind: input, shape index: {}]
  %s1 = inlined_call_operand.hbm [shape: f32[1029,128], index: 1, kind: input, shape index: {}]
  %s2 = inlined_call_operand.hbm [shape: f32[1029,128], index: 2, kind: output, shape index: {}]
  %s3 = sld [smem:[#allocation0]]
  $region26: #{tpu_custom_call.1} parent=0
    _
  %s5 = ssub.s32 1, %s3
  %s6 = scalar_select 0, %s5, %s3
  $region1: #{tpu_custom_call.1} parent=0
    #allocation2 [shape = 'u8[528384]{0}', space=vmem, size = 0x81000, scoped, tag = 'input window, operand 0, single buffered']
    #allocation3 [shape = 's32[1]{0}', space=sflag, size = 0x4, scoped, tag = 'scoped memory for tpu_custom_call.1']
    #allocation4 [shape = 's32[1]{0}', space=sflag, size = 0x4, scoped, tag = 'scoped memory for tpu_custom_call.1']
    #allocation5 [shape = 'u8[528384]{0}', space=vmem, size = 0x81000, scoped, tag = 'input window, operand 1, single buffered']
    #allocation6 [shape = 's32[1]{0}', space=sflag, size = 0x4, scoped, tag = 'scoped memory for tpu_custom_call.1']
    #allocation7 [shape = 'u8[528384]{0}', space=vmem, size = 0x81000, scoped, tag = 'output window, operand 0, single buffered']
    %7 = vsyncpa [#allocation3], 0
    %8 = vsyncpa [#allocation6], 0
    %9 = vsyncpa [#allocation4], 0
    // Predicated region
    $region2: #{tpu_custom_call.1} parent=1 // pred_check
      _
    $region3: #{tpu_custom_call.1} parent=1 // pred_check_branch
      %11 = sbr.rel (0) target = $region5
    $region4: #{tpu_custom_call.1} parent=1 // pred_region
      %13 = vsyncadd [#allocation3], 0
      %s14 = sshll.u32 %s0, 4
      %s15 = int_to_ptr.hbm [resolvable:$true] %s14
      %s16 = sshll.u32 [#allocation2], 4
      %s17 = int_to_ptr.vmem [resolvable:$true] %s16
      %22 = dma.hbm_to_vmem [thread:$0]  %s15, 16512, %s17, [#allocation3], 128, 128, 8
    $region5: #{tpu_custom_call.1} parent=1 // pred_fallthru
      _
    // Predicated region
    $region6: #{tpu_custom_call.1} parent=1 // pred_check
      _
    $region7: #{tpu_custom_call.1} parent=1 // pred_check_branch
      %24 = sbr.rel (0) target = $region9
    $region8: #{tpu_custom_call.1} parent=1 // pred_region
      %26 = vsyncadd [#allocation6], 0
      %s27 = sshll.u32 %s1, 4
      %s28 = int_to_ptr.hbm [resolvable:$true] %s27
      %s29 = sshll.u32 [#allocation5], 4
      %s30 = int_to_ptr.vmem [resolvable:$true] %s29
      %35 = dma.hbm_to_vmem [thread:$0]  %s28, 16512, %s30, [#allocation6], 128, 128, 8
    $region9: #{tpu_custom_call.1} parent=1 // pred_fallthru
      _
    // Predicated region
    $region10: #{tpu_custom_call.1} parent=1 // pred_check
      _
    $region11: #{tpu_custom_call.1} parent=1 // pred_check_branch
      %37 = sbr.rel (0) target = $region13
    $region12: #{tpu_custom_call.1} parent=1 // pred_region
      %39 = dma.done [#allocation3], 16512
    $region13: #{tpu_custom_call.1} parent=1 // pred_fallthru
      _
    // Predicated region
    $region14: #{tpu_custom_call.1} parent=1 // pred_check
      _
    $region15: #{tpu_custom_call.1} parent=1 // pred_check_branch
      %41 = sbr.rel (0) target = $region17
    $region16: #{tpu_custom_call.1} parent=1 // pred_region
      %43 = dma.done [#allocation6], 16512
    $region17: #{tpu_custom_call.1} parent=1 // pred_fallthru
      _
    %v44 = vld [vmem:[#allocation2] sm:$0xff]
    %v45 = vld [vmem:[#allocation2 + $0x8] sm:$0xff]
    %v46 = vld [vmem:[#allocation2 + $0x10] sm:$0xff]
    %v47 = vld [vmem:[#allocation2 + $0x18] sm:$0xff]
    %v48 = vld [vmem:[#allocation2 + $0x20] sm:$0xff]
    %v49 = vld [vmem:[#allocation2 + $0x28] sm:$0xff]
    %v50 = vld [vmem:[#allocation2 + $0x30] sm:$0xff]
    %v51 = vld [vmem:[#allocation2 + $0x38] sm:$0xff]
    %v52 = vld [vmem:[#allocation2 + $0x40] sm:$0xff]
    %v53 = vld [vmem:[#allocation2 + $0x48] sm:$0xff]
    %v54 = vld [vmem:[#allocation2 + $0x50] sm:$0xff]
    %v55 = vld [vmem:[#allocation2 + $0x58] sm:$0xff]
    %v56 = vld [vmem:[#allocation2 + $0x60] sm:$0xff]
    %v57 = vld [vmem:[#allocation2 + $0x68] sm:$0xff]
    %v58 = vld [vmem:[#allocation2 + $0x70] sm:$0xff]
    %v59 = vld [vmem:[#allocation2 + $0x78] sm:$0xff]
    %v60 = vld [vmem:[#allocation2 + $0x80] sm:$0xff]
    %v61 = vld [vmem:[#allocation2 + $0x88] sm:$0xff]
    %v62 = vld [vmem:[#allocation2 + $0x90] sm:$0xff]
    %v63 = vld [vmem:[#allocation2 + $0x98] sm:$0xff]
    %v64 = vld [vmem:[#allocation2 + $0xa0] sm:$0xff]
    %v65 = vld [vmem:[#allocation2 + $0xa8] sm:$0xff]
    %v66 = vld [vmem:[#allocation2 + $0xb0] sm:$0xff]
    %v67 = vld [vmem:[#allocation2 + $0xb8] sm:$0xff]
    %v68 = vld [vmem:[#allocation2 + $0xc0] sm:$0xff]
    %v69 = vld [vmem:[#allocation2 + $0xc8] sm:$0xff]
    %v70 = vld [vmem:[#allocation2 + $0xd0] sm:$0xff]
    %v71 = vld [vmem:[#allocation2 + $0xd8] sm:$0xff]
    %v72 = vld [vmem:[#allocation2 + $0xe0] sm:$0xff]
    %v73 = vld [vmem:[#allocation2 + $0xe8] sm:$0xff]
    %v74 = vld [vmem:[#allocation2 + $0xf0] sm:$0xff]
    %v75 = vld [vmem:[#allocation2 + $0xf8] sm:$0xff]
    %v76 = vld [vmem:[#allocation2 + $0x100] sm:$0xff]
    %v77 = vld [vmem:[#allocation2 + $0x108] sm:$0xff]
    %v78 = vld [vmem:[#allocation2 + $0x110] sm:$0xff]
    %v79 = vld [vmem:[#allocation2 + $0x118] sm:$0xff]
    %v80 = vld [vmem:[#allocation2 + $0x120] sm:$0xff]
    %v81 = vld [vmem:[#allocation2 + $0x128] sm:$0xff]
    %v82 = vld [vmem:[#allocation2 + $0x130] sm:$0xff]
    %v83 = vld [vmem:[#allocation2 + $0x138] sm:$0xff]
    %v84 = vld [vmem:[#allocation2 + $0x140] sm:$0xff]
    %v85 = vld [vmem:[#allocation2 + $0x148] sm:$0xff]
    %v86 = vld [vmem:[#allocation2 + $0x150] sm:$0xff]
    %v87 = vld [vmem:[#allocation2 + $0x158] sm:$0xff]
    %v88 = vld [vmem:[#allocation2 + $0x160] sm:$0xff]
    %v89 = vld [vmem:[#allocation2 + $0x168] sm:$0xff]
    %v90 = vld [vmem:[#allocation2 + $0x170] sm:$0xff]
    %v91 = vld [vmem:[#allocation2 + $0x178] sm:$0xff]
    %v92 = vld [vmem:[#allocation2 + $0x180] sm:$0xff]
    %v93 = vld [vmem:[#allocation2 + $0x188] sm:$0xff]
    %v94 = vld [vmem:[#allocation2 + $0x190] sm:$0xff]
    %v95 = vld [vmem:[#allocation2 + $0x198] sm:$0xff]
    %v96 = vld [vmem:[#allocation2 + $0x1a0] sm:$0xff]
    %v97 = vld [vmem:[#allocation2 + $0x1a8] sm:$0xff]
    %v98 = vld [vmem:[#allocation2 + $0x1b0] sm:$0xff]
    %v99 = vld [vmem:[#allocation2 + $0x1b8] sm:$0xff]
    %v100 = vld [vmem:[#allocation2 + $0x1c0] sm:$0xff]
    %v101 = vld [vmem:[#allocation2 + $0x1c8] sm:$0xff]
    %v102 = vld [vmem:[#allocation2 + $0x1d0] sm:$0xff]
    %v103 = vld [vmem:[#allocation2 + $0x1d8] sm:$0xff]
    %v104 = vld [vmem:[#allocation2 + $0x1e0] sm:$0xff]
    %v105 = vld [vmem:[#allocation2 + $0x1e8] sm:$0xff]
    %v106 = vld [vmem:[#allocation2 + $0x1f0] sm:$0xff]
    %v107 = vld [vmem:[#allocation2 + $0x1f8] sm:$0xff]
    %v108 = vld [vmem:[#allocation2 + $0x200] sm:$0xff]
    %v109 = vld [vmem:[#allocation2 + $0x208] sm:$0xff]
    %v110 = vld [vmem:[#allocation2 + $0x210] sm:$0xff]
    %v111 = vld [vmem:[#allocation2 + $0x218] sm:$0xff]
    %v112 = vld [vmem:[#allocation2 + $0x220] sm:$0xff]
    %v113 = vld [vmem:[#allocation2 + $0x228] sm:$0xff]
    %v114 = vld [vmem:[#allocation2 + $0x230] sm:$0xff]
    %v115 = vld [vmem:[#allocation2 + $0x238] sm:$0xff]
    %v116 = vld [vmem:[#allocation2 + $0x240] sm:$0xff]
    %v117 = vld [vmem:[#allocation2 + $0x248] sm:$0xff]
    %v118 = vld [vmem:[#allocation2 + $0x250] sm:$0xff]
    %v119 = vld [vmem:[#allocation2 + $0x258] sm:$0xff]
    %v120 = vld [vmem:[#allocation2 + $0x260] sm:$0xff]
    %v121 = vld [vmem:[#allocation2 + $0x268] sm:$0xff]
    %v122 = vld [vmem:[#allocation2 + $0x270] sm:$0xff]
    %v123 = vld [vmem:[#allocation2 + $0x278] sm:$0xff]
    %v124 = vld [vmem:[#allocation2 + $0x280] sm:$0xff]
    %v125 = vld [vmem:[#allocation2 + $0x288] sm:$0xff]
    %v126 = vld [vmem:[#allocation2 + $0x290] sm:$0xff]
    %v127 = vld [vmem:[#allocation2 + $0x298] sm:$0xff]
    %v128 = vld [vmem:[#allocation2 + $0x2a0] sm:$0xff]
    %v129 = vld [vmem:[#allocation2 + $0x2a8] sm:$0xff]
    %v130 = vld [vmem:[#allocation2 + $0x2b0] sm:$0xff]
    %v131 = vld [vmem:[#allocation2 + $0x2b8] sm:$0xff]
    %v132 = vld [vmem:[#allocation2 + $0x2c0] sm:$0xff]
    %v133 = vld [vmem:[#allocation2 + $0x2c8] sm:$0xff]
    %v134 = vld [vmem:[#allocation2 + $0x2d0] sm:$0xff]
    %v135 = vld [vmem:[#allocation2 + $0x2d8] sm:$0xff]
    %v136 = vld [vmem:[#allocation2 + $0x2e0] sm:$0xff]
    %v137 = vld [vmem:[#allocation2 + $0x2e8] sm:$0xff]
    %v138 = vld [vmem:[#allocation2 + $0x2f0] sm:$0xff]
    %v139 = vld [vmem:[#allocation2 + $0x2f8] sm:$0xff]
    %v140 = vld [vmem:[#allocation2 + $0x300] sm:$0xff]
    %v141 = vld [vmem:[#allocation2 + $0x308] sm:$0xff]
    %v142 = vld [vmem:[#allocation2 + $0x310] sm:$0xff]
    %v143 = vld [vmem:[#allocation2 + $0x318] sm:$0xff]
    %v144 = vld [vmem:[#allocation2 + $0x320] sm:$0xff]
    %v145 = vld [vmem:[#allocation2 + $0x328] sm:$0xff]
    %v146 = vld [vmem:[#allocation2 + $0x330] sm:$0xff]
    %v147 = vld [vmem:[#allocation2 + $0x338] sm:$0xff]
    %v148 = vld [vmem:[#allocation2 + $0x340] sm:$0xff]
    %v149 = vld [vmem:[#allocation2 + $0x348] sm:$0xff]
    %v150 = vld [vmem:[#allocation2 + $0x350] sm:$0xff]
    %v151 = vld [vmem:[#allocation2 + $0x358] sm:$0xff]
    %v152 = vld [vmem:[#allocation2 + $0x360] sm:$0xff]
    %v153 = vld [vmem:[#allocation2 + $0x368] sm:$0xff]
    %v154 = vld [vmem:[#allocation2 + $0x370] sm:$0xff]
    %v155 = vld [vmem:[#allocation2 + $0x378] sm:$0xff]
    %v156 = vld [vmem:[#allocation2 + $0x380] sm:$0xff]
    %v157 = vld [vmem:[#allocation2 + $0x388] sm:$0xff]
    %v158 = vld [vmem:[#allocation2 + $0x390] sm:$0xff]
    %v159 = vld [vmem:[#allocation2 + $0x398] sm:$0xff]
    %v160 = vld [vmem:[#allocation2 + $0x3a0] sm:$0xff]
    %v161 = vld [vmem:[#allocation2 + $0x3a8] sm:$0xff]
    %v162 = vld [vmem:[#allocation2 + $0x3b0] sm:$0xff]
    %v163 = vld [vmem:[#allocation2 + $0x3b8] sm:$0xff]
    %v164 = vld [vmem:[#allocation2 + $0x3c0] sm:$0xff]
    %v165 = vld [vmem:[#allocation2 + $0x3c8] sm:$0xff]
    %v166 = vld [vmem:[#allocation2 + $0x3d0] sm:$0xff]
    %v167 = vld [vmem:[#allocation2 + $0x3d8] sm:$0xff]
    %v168 = vld [vmem:[#allocation2 + $0x3e0] sm:$0xff]
    %v169 = vld [vmem:[#allocation2 + $0x3e8] sm:$0xff]
    %v170 = vld [vmem:[#allocation2 + $0x3f0] sm:$0xff]
    %v171 = vld [vmem:[#allocation2 + $0x3f8] sm:$0xff]
    %v172 = vld [vmem:[#allocation2 + $0x400] sm:$0x1f]
    %v173 = vld [vmem:[#allocation5] sm:$0xff]
    %v174 = vld [vmem:[#allocation5 + $0x8] sm:$0xff]
    %v175 = vld [vmem:[#allocation5 + $0x10] sm:$0xff]
    %v176 = vld [vmem:[#allocation5 + $0x18] sm:$0xff]
    %v177 = vld [vmem:[#allocation5 + $0x20] sm:$0xff]
    %v178 = vld [vmem:[#allocation5 + $0x28] sm:$0xff]
    %v179 = vld [vmem:[#allocation5 + $0x30] sm:$0xff]
    %v180 = vld [vmem:[#allocation5 + $0x38] sm:$0xff]
    %v181 = vld [vmem:[#allocation5 + $0x40] sm:$0xff]
    %v182 = vld [vmem:[#allocation5 + $0x48] sm:$0xff]
    %v183 = vld [vmem:[#allocation5 + $0x50] sm:$0xff]
    %v184 = vld [vmem:[#allocation5 + $0x58] sm:$0xff]
    %v185 = vld [vmem:[#allocation5 + $0x60] sm:$0xff]
    %v186 = vld [vmem:[#allocation5 + $0x68] sm:$0xff]
    %v187 = vld [vmem:[#allocation5 + $0x70] sm:$0xff]
    %v188 = vld [vmem:[#allocation5 + $0x78] sm:$0xff]
    %v189 = vld [vmem:[#allocation5 + $0x80] sm:$0xff]
    %v190 = vld [vmem:[#allocation5 + $0x88] sm:$0xff]
    %v191 = vld [vmem:[#allocation5 + $0x90] sm:$0xff]
    %v192 = vld [vmem:[#allocation5 + $0x98] sm:$0xff]
    %v193 = vld [vmem:[#allocation5 + $0xa0] sm:$0xff]
    %v194 = vld [vmem:[#allocation5 + $0xa8] sm:$0xff]
    %v195 = vld [vmem:[#allocation5 + $0xb0] sm:$0xff]
    %v196 = vld [vmem:[#allocation5 + $0xb8] sm:$0xff]
    %v197 = vld [vmem:[#allocation5 + $0xc0] sm:$0xff]
    %v198 = vld [vmem:[#allocation5 + $0xc8] sm:$0xff]
    %v199 = vld [vmem:[#allocation5 + $0xd0] sm:$0xff]
    %v200 = vld [vmem:[#allocation5 + $0xd8] sm:$0xff]
    %v201 = vld [vmem:[#allocation5 + $0xe0] sm:$0xff]
    %v202 = vld [vmem:[#allocation5 + $0xe8] sm:$0xff]
    %v203 = vld [vmem:[#allocation5 + $0xf0] sm:$0xff]
    %v204 = vld [vmem:[#allocation5 + $0xf8] sm:$0xff]
    %v205 = vld [vmem:[#allocation5 + $0x100] sm:$0xff]
    %v206 = vld [vmem:[#allocation5 + $0x108] sm:$0xff]
    %v207 = vld [vmem:[#allocation5 + $0x110] sm:$0xff]
    %v208 = vld [vmem:[#allocation5 + $0x118] sm:$0xff]
    %v209 = vld [vmem:[#allocation5 + $0x120] sm:$0xff]
    %v210 = vld [vmem:[#allocation5 + $0x128] sm:$0xff]
    %v211 = vld [vmem:[#allocation5 + $0x130] sm:$0xff]
    %v212 = vld [vmem:[#allocation5 + $0x138] sm:$0xff]
    %v213 = vld [vmem:[#allocation5 + $0x140] sm:$0xff]
    %v214 = vld [vmem:[#allocation5 + $0x148] sm:$0xff]
    %v215 = vld [vmem:[#allocation5 + $0x150] sm:$0xff]
    %v216 = vld [vmem:[#allocation5 + $0x158] sm:$0xff]
    %v217 = vld [vmem:[#allocation5 + $0x160] sm:$0xff]
    %v218 = vld [vmem:[#allocation5 + $0x168] sm:$0xff]
    %v219 = vld [vmem:[#allocation5 + $0x170] sm:$0xff]
    %v220 = vld [vmem:[#allocation5 + $0x178] sm:$0xff]
    %v221 = vld [vmem:[#allocation5 + $0x180] sm:$0xff]
    %v222 = vld [vmem:[#allocation5 + $0x188] sm:$0xff]
    %v223 = vld [vmem:[#allocation5 + $0x190] sm:$0xff]
    %v224 = vld [vmem:[#allocation5 + $0x198] sm:$0xff]
    %v225 = vld [vmem:[#allocation5 + $0x1a0] sm:$0xff]
    %v226 = vld [vmem:[#allocation5 + $0x1a8] sm:$0xff]
    %v227 = vld [vmem:[#allocation5 + $0x1b0] sm:$0xff]
    %v228 = vld [vmem:[#allocation5 + $0x1b8] sm:$0xff]
    %v229 = vld [vmem:[#allocation5 + $0x1c0] sm:$0xff]
    %v230 = vld [vmem:[#allocation5 + $0x1c8] sm:$0xff]
    %v231 = vld [vmem:[#allocation5 + $0x1d0] sm:$0xff]
    %v232 = vld [vmem:[#allocation5 + $0x1d8] sm:$0xff]
    %v233 = vld [vmem:[#allocation5 + $0x1e0] sm:$0xff]
    %v234 = vld [vmem:[#allocation5 + $0x1e8] sm:$0xff]
    %v235 = vld [vmem:[#allocation5 + $0x1f0] sm:$0xff]
    %v236 = vld [vmem:[#allocation5 + $0x1f8] sm:$0xff]
    %v237 = vld [vmem:[#allocation5 + $0x200] sm:$0xff]
    %v238 = vld [vmem:[#allocation5 + $0x208] sm:$0xff]
    %v239 = vld [vmem:[#allocation5 + $0x210] sm:$0xff]
    %v240 = vld [vmem:[#allocation5 + $0x218] sm:$0xff]
    %v241 = vld [vmem:[#allocation5 + $0x220] sm:$0xff]
    %v242 = vld [vmem:[#allocation5 + $0x228] sm:$0xff]
    %v243 = vld [vmem:[#allocation5 + $0x230] sm:$0xff]
    %v244 = vld [vmem:[#allocation5 + $0x238] sm:$0xff]
    %v245 = vld [vmem:[#allocation5 + $0x240] sm:$0xff]
    %v246 = vld [vmem:[#allocation5 + $0x248] sm:$0xff]
    %v247 = vld [vmem:[#allocation5 + $0x250] sm:$0xff]
    %v248 = vld [vmem:[#allocation5 + $0x258] sm:$0xff]
    %v249 = vld [vmem:[#allocation5 + $0x260] sm:$0xff]
    %v250 = vld [vmem:[#allocation5 + $0x268] sm:$0xff]
    %v251 = vld [vmem:[#allocation5 + $0x270] sm:$0xff]
    %v252 = vld [vmem:[#allocation5 + $0x278] sm:$0xff]
    %v253 = vld [vmem:[#allocation5 + $0x280] sm:$0xff]
    %v254 = vld [vmem:[#allocation5 + $0x288] sm:$0xff]
    %v255 = vld [vmem:[#allocation5 + $0x290] sm:$0xff]
    %v256 = vld [vmem:[#allocation5 + $0x298] sm:$0xff]
    %v257 = vld [vmem:[#allocation5 + $0x2a0] sm:$0xff]
    %v258 = vld [vmem:[#allocation5 + $0x2a8] sm:$0xff]
    %v259 = vld [vmem:[#allocation5 + $0x2b0] sm:$0xff]
    %v260 = vld [vmem:[#allocation5 + $0x2b8] sm:$0xff]
    %v261 = vld [vmem:[#allocation5 + $0x2c0] sm:$0xff]
    %v262 = vld [vmem:[#allocation5 + $0x2c8] sm:$0xff]
    %v263 = vld [vmem:[#allocation5 + $0x2d0] sm:$0xff]
    %v264 = vld [vmem:[#allocation5 + $0x2d8] sm:$0xff]
    %v265 = vld [vmem:[#allocation5 + $0x2e0] sm:$0xff]
    %v266 = vld [vmem:[#allocation5 + $0x2e8] sm:$0xff]
    %v267 = vld [vmem:[#allocation5 + $0x2f0] sm:$0xff]
    %v268 = vld [vmem:[#allocation5 + $0x2f8] sm:$0xff]
    %v269 = vld [vmem:[#allocation5 + $0x300] sm:$0xff]
    %v270 = vld [vmem:[#allocation5 + $0x308] sm:$0xff]
    %v271 = vld [vmem:[#allocation5 + $0x310] sm:$0xff]
    %v272 = vld [vmem:[#allocation5 + $0x318] sm:$0xff]
    %v273 = vld [vmem:[#allocation5 + $0x320] sm:$0xff]
    %v274 = vld [vmem:[#allocation5 + $0x328] sm:$0xff]
    %v275 = vld [vmem:[#allocation5 + $0x330] sm:$0xff]
    %v276 = vld [vmem:[#allocation5 + $0x338] sm:$0xff]
    %v277 = vld [vmem:[#allocation5 + $0x340] sm:$0xff]
    %v278 = vld [vmem:[#allocation5 + $0x348] sm:$0xff]
    %v279 = vld [vmem:[#allocation5 + $0x350] sm:$0xff]
    %v280 = vld [vmem:[#allocation5 + $0x358] sm:$0xff]
    %v281 = vld [vmem:[#allocation5 + $0x360] sm:$0xff]
    %v282 = vld [vmem:[#allocation5 + $0x368] sm:$0xff]
    %v283 = vld [vmem:[#allocation5 + $0x370] sm:$0xff]
    %v284 = vld [vmem:[#allocation5 + $0x378] sm:$0xff]
    %v285 = vld [vmem:[#allocation5 + $0x380] sm:$0xff]
    %v286 = vld [vmem:[#allocation5 + $0x388] sm:$0xff]
    %v287 = vld [vmem:[#allocation5 + $0x390] sm:$0xff]
    %v288 = vld [vmem:[#allocation5 + $0x398] sm:$0xff]
    %v289 = vld [vmem:[#allocation5 + $0x3a0] sm:$0xff]
    %v290 = vld [vmem:[#allocation5 + $0x3a8] sm:$0xff]
    %v291 = vld [vmem:[#allocation5 + $0x3b0] sm:$0xff]
    %v292 = vld [vmem:[#allocation5 + $0x3b8] sm:$0xff]
    %v293 = vld [vmem:[#allocation5 + $0x3c0] sm:$0xff]
    %v294 = vld [vmem:[#allocation5 + $0x3c8] sm:$0xff]
    %v295 = vld [vmem:[#allocation5 + $0x3d0] sm:$0xff]
    %v296 = vld [vmem:[#allocation5 + $0x3d8] sm:$0xff]
    %v297 = vld [vmem:[#allocation5 + $0x3e0] sm:$0xff]
    %v298 = vld [vmem:[#allocation5 + $0x3e8] sm:$0xff]
    %v299 = vld [vmem:[#allocation5 + $0x3f0] sm:$0xff]
    %v300 = vld [vmem:[#allocation5 + $0x3f8] sm:$0xff]
    %v301 = vld [vmem:[#allocation5 + $0x400] sm:$0x1f]
    %v302 = vadd.f32 %v44, %v173
    %v303 = vadd.f32 %v45, %v174
    %v304 = vadd.f32 %v46, %v175
    %v305 = vadd.f32 %v47, %v176
    %v306 = vadd.f32 %v48, %v177
    %v307 = vadd.f32 %v49, %v178
    %v308 = vadd.f32 %v50, %v179
    %v309 = vadd.f32 %v51, %v180
    %v310 = vadd.f32 %v52, %v181
    %v311 = vadd.f32 %v53, %v182
    %v312 = vadd.f32 %v54, %v183
    %v313 = vadd.f32 %v55, %v184
    %v314 = vadd.f32 %v56, %v185
    %v315 = vadd.f32 %v57, %v186
    %v316 = vadd.f32 %v58, %v187
    %v317 = vadd.f32 %v59, %v188
    %v318 = vadd.f32 %v60, %v189
    %v319 = vadd.f32 %v61, %v190
    %v320 = vadd.f32 %v62, %v191
    %v321 = vadd.f32 %v63, %v192
    %v322 = vadd.f32 %v64, %v193
    %v323 = vadd.f32 %v65, %v194
    %v324 = vadd.f32 %v66, %v195
    %v325 = vadd.f32 %v67, %v196
    %v326 = vadd.f32 %v68, %v197
    %v327 = vadd.f32 %v69, %v198
    %v328 = vadd.f32 %v70, %v199
    %v329 = vadd.f32 %v71, %v200
    %v330 = vadd.f32 %v72, %v201
    %v331 = vadd.f32 %v73, %v202
    %v332 = vadd.f32 %v74, %v203
    %v333 = vadd.f32 %v75, %v204
    %v334 = vadd.f32 %v76, %v205
    %v335 = vadd.f32 %v77, %v206
    %v336 = vadd.f32 %v78, %v207
    %v337 = vadd.f32 %v79, %v208
    %v338 = vadd.f32 %v80, %v209
    %v339 = vadd.f32 %v81, %v210
    %v340 = vadd.f32 %v82, %v211
    %v341 = vadd.f32 %v83, %v212
    %v342 = vadd.f32 %v84, %v213
    %v343 = vadd.f32 %v85, %v214
    %v344 = vadd.f32 %v86, %v215
    %v345 = vadd.f32 %v87, %v216
    %v346 = vadd.f32 %v88, %v217
    %v347 = vadd.f32 %v89, %v218
    %v348 = vadd.f32 %v90, %v219
    %v349 = vadd.f32 %v91, %v220
    %v350 = vadd.f32 %v92, %v221
    %v351 = vadd.f32 %v93, %v222
    %v352 = vadd.f32 %v94, %v223
    %v353 = vadd.f32 %v95, %v224
    %v354 = vadd.f32 %v96, %v225
    %v355 = vadd.f32 %v97, %v226
    %v356 = vadd.f32 %v98, %v227
    %v357 = vadd.f32 %v99, %v228
    %v358 = vadd.f32 %v100, %v229
    %v359 = vadd.f32 %v101, %v230
    %v360 = vadd.f32 %v102, %v231
    %v361 = vadd.f32 %v103, %v232
    %v362 = vadd.f32 %v104, %v233
    %v363 = vadd.f32 %v105, %v234
    %v364 = vadd.f32 %v106, %v235
    %v365 = vadd.f32 %v107, %v236
    %v366 = vadd.f32 %v108, %v237
    %v367 = vadd.f32 %v109, %v238
    %v368 = vadd.f32 %v110, %v239
    %v369 = vadd.f32 %v111, %v240
    %v370 = vadd.f32 %v112, %v241
    %v371 = vadd.f32 %v113, %v242
    %v372 = vadd.f32 %v114, %v243
    %v373 = vadd.f32 %v115, %v244
    %v374 = vadd.f32 %v116, %v245
    %v375 = vadd.f32 %v117, %v246
    %v376 = vadd.f32 %v118, %v247
    %v377 = vadd.f32 %v119, %v248
    %v378 = vadd.f32 %v120, %v249
    %v379 = vadd.f32 %v121, %v250
    %v380 = vadd.f32 %v122, %v251
    %v381 = vadd.f32 %v123, %v252
    %v382 = vadd.f32 %v124, %v253
    %v383 = vadd.f32 %v125, %v254
    %v384 = vadd.f32 %v126, %v255
    %v385 = vadd.f32 %v127, %v256
    %v386 = vadd.f32 %v128, %v257
    %v387 = vadd.f32 %v129, %v258
    %v388 = vadd.f32 %v130, %v259
    %v389 = vadd.f32 %v131, %v260
    %v390 = vadd.f32 %v132, %v261
    %v391 = vadd.f32 %v133, %v262
    %v392 = vadd.f32 %v134, %v263
    %v393 = vadd.f32 %v135, %v264
    %v394 = vadd.f32 %v136, %v265
    %v395 = vadd.f32 %v137, %v266
    %v396 = vadd.f32 %v138, %v267
    %v397 = vadd.f32 %v139, %v268
    %v398 = vadd.f32 %v140, %v269
    %v399 = vadd.f32 %v141, %v270
    %v400 = vadd.f32 %v142, %v271
    %v401 = vadd.f32 %v143, %v272
    %v402 = vadd.f32 %v144, %v273
    %v403 = vadd.f32 %v145, %v274
    %v404 = vadd.f32 %v146, %v275
    %v405 = vadd.f32 %v147, %v276
    %v406 = vadd.f32 %v148, %v277
    %v407 = vadd.f32 %v149, %v278
    %v408 = vadd.f32 %v150, %v279
    %v409 = vadd.f32 %v151, %v280
    %v410 = vadd.f32 %v152, %v281
    %v411 = vadd.f32 %v153, %v282
    %v412 = vadd.f32 %v154, %v283
    %v413 = vadd.f32 %v155, %v284
    %v414 = vadd.f32 %v156, %v285
    %v415 = vadd.f32 %v157, %v286
    %v416 = vadd.f32 %v158, %v287
    %v417 = vadd.f32 %v159, %v288
    %v418 = vadd.f32 %v160, %v289
    %v419 = vadd.f32 %v161, %v290
    %v420 = vadd.f32 %v162, %v291
    %v421 = vadd.f32 %v163, %v292
    %v422 = vadd.f32 %v164, %v293
    %v423 = vadd.f32 %v165, %v294
    %v424 = vadd.f32 %v166, %v295
    %v425 = vadd.f32 %v167, %v296
    %v426 = vadd.f32 %v168, %v297
    %v427 = vadd.f32 %v169, %v298
    %v428 = vadd.f32 %v170, %v299
    %v429 = vadd.f32 %v171, %v300
    %v430 = vadd.f32 %v172, %v301
    %431 = vst [vmem:[#allocation7] sm:$0xff] %v302
    %432 = vst [vmem:[#allocation7 + $0x8] sm:$0xff] %v303
    %433 = vst [vmem:[#allocation7 + $0x10] sm:$0xff] %v304
    %434 = vst [vmem:[#allocation7 + $0x18] sm:$0xff] %v305
    %435 = vst [vmem:[#allocation7 + $0x20] sm:$0xff] %v306
    %436 = vst [vmem:[#allocation7 + $0x28] sm:$0xff] %v307
    %437 = vst [vmem:[#allocation7 + $0x30] sm:$0xff] %v308
    %438 = vst [vmem:[#allocation7 + $0x38] sm:$0xff] %v309
    %439 = vst [vmem:[#allocation7 + $0x40] sm:$0xff] %v310
    %440 = vst [vmem:[#allocation7 + $0x48] sm:$0xff] %v311
    %441 = vst [vmem:[#allocation7 + $0x50] sm:$0xff] %v312
    %442 = vst [vmem:[#allocation7 + $0x58] sm:$0xff] %v313
    %443 = vst [vmem:[#allocation7 + $0x60] sm:$0xff] %v314
    %444 = vst [vmem:[#allocation7 + $0x68] sm:$0xff] %v315
    %445 = vst [vmem:[#allocation7 + $0x70] sm:$0xff] %v316
    %446 = vst [vmem:[#allocation7 + $0x78] sm:$0xff] %v317
    %447 = vst [vmem:[#allocation7 + $0x80] sm:$0xff] %v318
    %448 = vst [vmem:[#allocation7 + $0x88] sm:$0xff] %v319
    %449 = vst [vmem:[#allocation7 + $0x90] sm:$0xff] %v320
    %450 = vst [vmem:[#allocation7 + $0x98] sm:$0xff] %v321
    %451 = vst [vmem:[#allocation7 + $0xa0] sm:$0xff] %v322
    %452 = vst [vmem:[#allocation7 + $0xa8] sm:$0xff] %v323
    %453 = vst [vmem:[#allocation7 + $0xb0] sm:$0xff] %v324
    %454 = vst [vmem:[#allocation7 + $0xb8] sm:$0xff] %v325
    %455 = vst [vmem:[#allocation7 + $0xc0] sm:$0xff] %v326
    %456 = vst [vmem:[#allocation7 + $0xc8] sm:$0xff] %v327
    %457 = vst [vmem:[#allocation7 + $0xd0] sm:$0xff] %v328
    %458 = vst [vmem:[#allocation7 + $0xd8] sm:$0xff] %v329
    %459 = vst [vmem:[#allocation7 + $0xe0] sm:$0xff] %v330
    %460 = vst [vmem:[#allocation7 + $0xe8] sm:$0xff] %v331
    %461 = vst [vmem:[#allocation7 + $0xf0] sm:$0xff] %v332
    %462 = vst [vmem:[#allocation7 + $0xf8] sm:$0xff] %v333
    %463 = vst [vmem:[#allocation7 + $0x100] sm:$0xff] %v334
    %464 = vst [vmem:[#allocation7 + $0x108] sm:$0xff] %v335
    %465 = vst [vmem:[#allocation7 + $0x110] sm:$0xff] %v336
    %466 = vst [vmem:[#allocation7 + $0x118] sm:$0xff] %v337
    %467 = vst [vmem:[#allocation7 + $0x120] sm:$0xff] %v338
    %468 = vst [vmem:[#allocation7 + $0x128] sm:$0xff] %v339
    %469 = vst [vmem:[#allocation7 + $0x130] sm:$0xff] %v340
    %470 = vst [vmem:[#allocation7 + $0x138] sm:$0xff] %v341
    %471 = vst [vmem:[#allocation7 + $0x140] sm:$0xff] %v342
    %472 = vst [vmem:[#allocation7 + $0x148] sm:$0xff] %v343
    %473 = vst [vmem:[#allocation7 + $0x150] sm:$0xff] %v344
    %474 = vst [vmem:[#allocation7 + $0x158] sm:$0xff] %v345
    %475 = vst [vmem:[#allocation7 + $0x160] sm:$0xff] %v346
    %476 = vst [vmem:[#allocation7 + $0x168] sm:$0xff] %v347
    %477 = vst [vmem:[#allocation7 + $0x170] sm:$0xff] %v348
    %478 = vst [vmem:[#allocation7 + $0x178] sm:$0xff] %v349
    %479 = vst [vmem:[#allocation7 + $0x180] sm:$0xff] %v350
    %480 = vst [vmem:[#allocation7 + $0x188] sm:$0xff] %v351
    %481 = vst [vmem:[#allocation7 + $0x190] sm:$0xff] %v352
    %482 = vst [vmem:[#allocation7 + $0x198] sm:$0xff] %v353
    %483 = vst [vmem:[#allocation7 + $0x1a0] sm:$0xff] %v354
    %484 = vst [vmem:[#allocation7 + $0x1a8] sm:$0xff] %v355
    %485 = vst [vmem:[#allocation7 + $0x1b0] sm:$0xff] %v356
    %486 = vst [vmem:[#allocation7 + $0x1b8] sm:$0xff] %v357
    %487 = vst [vmem:[#allocation7 + $0x1c0] sm:$0xff] %v358
    %488 = vst [vmem:[#allocation7 + $0x1c8] sm:$0xff] %v359
    %489 = vst [vmem:[#allocation7 + $0x1d0] sm:$0xff] %v360
    %490 = vst [vmem:[#allocation7 + $0x1d8] sm:$0xff] %v361
    %491 = vst [vmem:[#allocation7 + $0x1e0] sm:$0xff] %v362
    %492 = vst [vmem:[#allocation7 + $0x1e8] sm:$0xff] %v363
    %493 = vst [vmem:[#allocation7 + $0x1f0] sm:$0xff] %v364
    %494 = vst [vmem:[#allocation7 + $0x1f8] sm:$0xff] %v365
    %495 = vst [vmem:[#allocation7 + $0x200] sm:$0xff] %v366
    %496 = vst [vmem:[#allocation7 + $0x208] sm:$0xff] %v367
    %497 = vst [vmem:[#allocation7 + $0x210] sm:$0xff] %v368
    %498 = vst [vmem:[#allocation7 + $0x218] sm:$0xff] %v369
    %499 = vst [vmem:[#allocation7 + $0x220] sm:$0xff] %v370
    %500 = vst [vmem:[#allocation7 + $0x228] sm:$0xff] %v371
    %501 = vst [vmem:[#allocation7 + $0x230] sm:$0xff] %v372
    %502 = vst [vmem:[#allocation7 + $0x238] sm:$0xff] %v373
    %503 = vst [vmem:[#allocation7 + $0x240] sm:$0xff] %v374
    %504 = vst [vmem:[#allocation7 + $0x248] sm:$0xff] %v375
    %505 = vst [vmem:[#allocation7 + $0x250] sm:$0xff] %v376
    %506 = vst [vmem:[#allocation7 + $0x258] sm:$0xff] %v377
    %507 = vst [vmem:[#allocation7 + $0x260] sm:$0xff] %v378
    %508 = vst [vmem:[#allocation7 + $0x268] sm:$0xff] %v379
    %509 = vst [vmem:[#allocation7 + $0x270] sm:$0xff] %v380
    %510 = vst [vmem:[#allocation7 + $0x278] sm:$0xff] %v381
    %511 = vst [vmem:[#allocation7 + $0x280] sm:$0xff] %v382
    %512 = vst [vmem:[#allocation7 + $0x288] sm:$0xff] %v383
    %513 = vst [vmem:[#allocation7 + $0x290] sm:$0xff] %v384
    %514 = vst [vmem:[#allocation7 + $0x298] sm:$0xff] %v385
    %515 = vst [vmem:[#allocation7 + $0x2a0] sm:$0xff] %v386
    %516 = vst [vmem:[#allocation7 + $0x2a8] sm:$0xff] %v387
    %517 = vst [vmem:[#allocation7 + $0x2b0] sm:$0xff] %v388
    %518 = vst [vmem:[#allocation7 + $0x2b8] sm:$0xff] %v389
    %519 = vst [vmem:[#allocation7 + $0x2c0] sm:$0xff] %v390
    %520 = vst [vmem:[#allocation7 + $0x2c8] sm:$0xff] %v391
    %521 = vst [vmem:[#allocation7 + $0x2d0] sm:$0xff] %v392
    %522 = vst [vmem:[#allocation7 + $0x2d8] sm:$0xff] %v393
    %523 = vst [vmem:[#allocation7 + $0x2e0] sm:$0xff] %v394
    %524 = vst [vmem:[#allocation7 + $0x2e8] sm:$0xff] %v395
    %525 = vst [vmem:[#allocation7 + $0x2f0] sm:$0xff] %v396
    %526 = vst [vmem:[#allocation7 + $0x2f8] sm:$0xff] %v397
    %527 = vst [vmem:[#allocation7 + $0x300] sm:$0xff] %v398
    %528 = vst [vmem:[#allocation7 + $0x308] sm:$0xff] %v399
    %529 = vst [vmem:[#allocation7 + $0x310] sm:$0xff] %v400
    %530 = vst [vmem:[#allocation7 + $0x318] sm:$0xff] %v401
    %531 = vst [vmem:[#allocation7 + $0x320] sm:$0xff] %v402
    %532 = vst [vmem:[#allocation7 + $0x328] sm:$0xff] %v403
    %533 = vst [vmem:[#allocation7 + $0x330] sm:$0xff] %v404
    %534 = vst [vmem:[#allocation7 + $0x338] sm:$0xff] %v405
    %535 = vst [vmem:[#allocation7 + $0x340] sm:$0xff] %v406
    %536 = vst [vmem:[#allocation7 + $0x348] sm:$0xff] %v407
    %537 = vst [vmem:[#allocation7 + $0x350] sm:$0xff] %v408
    %538 = vst [vmem:[#allocation7 + $0x358] sm:$0xff] %v409
    %539 = vst [vmem:[#allocation7 + $0x360] sm:$0xff] %v410
    %540 = vst [vmem:[#allocation7 + $0x368] sm:$0xff] %v411
    %541 = vst [vmem:[#allocation7 + $0x370] sm:$0xff] %v412
    %542 = vst [vmem:[#allocation7 + $0x378] sm:$0xff] %v413
    %543 = vst [vmem:[#allocation7 + $0x380] sm:$0xff] %v414
    %544 = vst [vmem:[#allocation7 + $0x388] sm:$0xff] %v415
    %545 = vst [vmem:[#allocation7 + $0x390] sm:$0xff] %v416
    %546 = vst [vmem:[#allocation7 + $0x398] sm:$0xff] %v417
    %547 = vst [vmem:[#allocation7 + $0x3a0] sm:$0xff] %v418
    %548 = vst [vmem:[#allocation7 + $0x3a8] sm:$0xff] %v419
    %549 = vst [vmem:[#allocation7 + $0x3b0] sm:$0xff] %v420
    %550 = vst [vmem:[#allocation7 + $0x3b8] sm:$0xff] %v421
    %551 = vst [vmem:[#allocation7 + $0x3c0] sm:$0xff] %v422
    %552 = vst [vmem:[#allocation7 + $0x3c8] sm:$0xff] %v423
    %553 = vst [vmem:[#allocation7 + $0x3d0] sm:$0xff] %v424
    %554 = vst [vmem:[#allocation7 + $0x3d8] sm:$0xff] %v425
    %555 = vst [vmem:[#allocation7 + $0x3e0] sm:$0xff] %v426
    %556 = vst [vmem:[#allocation7 + $0x3e8] sm:$0xff] %v427
    %557 = vst [vmem:[#allocation7 + $0x3f0] sm:$0xff] %v428
    %558 = vst [vmem:[#allocation7 + $0x3f8] sm:$0xff] %v429
    %559 = vst [vmem:[#allocation7 + $0x400] sm:$0x1f] %v430
    // Predicated region
    $region18: #{tpu_custom_call.1} parent=1 // pred_check
      _
    $region19: #{tpu_custom_call.1} parent=1 // pred_check_branch
      %561 = sbr.rel (0) target = $region21
    $region20: #{tpu_custom_call.1} parent=1 // pred_region
      %563 = vsyncadd [#allocation4], 0
      %s564 = sshll.u32 [#allocation7], 4
      %s565 = int_to_ptr.vmem [resolvable:$true] %s564
      %s566 = sshll.u32 %s2, 4
      %s567 = int_to_ptr.hbm [resolvable:$true] %s566
      %572 = dma.vmem_to_hbm [thread:$0]  %s565, 16512, %s567, [#allocation4], 128, 128, 8
    $region21: #{tpu_custom_call.1} parent=1 // pred_fallthru
      _
    // Predicated region
    $region22: #{tpu_custom_call.1} parent=1 // pred_check
      _
    $region23: #{tpu_custom_call.1} parent=1 // pred_check_branch
      %574 = sbr.rel (0) target = $region25
    $region24: #{tpu_custom_call.1} parent=1 // pred_region
      %576 = dma.done [#allocation4], 16512
    $region25: #{tpu_custom_call.1} parent=1 // pred_fallthru
      _
    %577 = vsyncpa [#allocation3], 1
    %578 = vsyncpa [#allocation6], 1
    %579 = vsyncpa [#allocation4], 1

</llo_original>
